<compile_context>
chip_gen: v6e
topology: v6e:2x2x1
jax: 0.10.0
libtpu: 0.0.40
codegen_flags: <defaults>
</compile_context>

<pallas_src>
import functools

import jax
import jax.numpy as jnp
from jax import lax
from jax.experimental import pallas as pl
from jax.experimental.pallas import tpu as pltpu
import numpy as np


# ---------------------------------------------------------------------------
# Kernels
# ---------------------------------------------------------------------------

def _channel_attention_fused_kernel(x_ref, beta_ref, o_ref, *, mxu_dtype):
    """Whole ChannelAttention for a (Bt, C, HW) block of batch elements."""
    x = x_ref[...]                                    # (Bt, C, HW) f32
    beta = beta_ref[0]                                # scalar from SMEM
    xm = x.astype(mxu_dtype)

    # attention[b, i, j] = sum_k x[b, i, k] * x[b, j, k]   (no transpose)
    att = lax.dot_general(
        xm, xm,
        dimension_numbers=(((2,), (2,)), ((0,), (0,))),
        preferred_element_type=jnp.float32)           # (Bt, C, C) f32

    # softmax(rowmax(att) - att) == softmax over (rowmin(att) - att):
    # single XLU reduce + one subtract, numerically identical.
    att_new = jnp.min(att, axis=-1, keepdims=True) - att
    e = jnp.exp(att_new)
    att = e * pl.reciprocal(jnp.sum(e, axis=-1, keepdims=True), approx=False)

    # feat_e = bmm(attention, feat_a)
    fe = lax.dot_general(
        att.astype(mxu_dtype), xm,
        dimension_numbers=(((2,), (1,)), ((0,), (0,))),
        preferred_element_type=jnp.float32)           # (Bt, C, HW) f32

    o_ref[...] = beta * fe + x


def _gram_softmax_kernel(x_ref, att_ref, acc_ref, *, mxu_dtype):
    """Pass 1 of the HW-tiled path: accumulate Gram over HW tiles, finalize softmax."""
    hw_i = pl.program_id(1)

    @pl.when(hw_i == 0)
    def _():
        acc_ref[...] = jnp.zeros_like(acc_ref)

    xm = x_ref[...].astype(mxu_dtype)                 # (Bt, C, thw)
    acc_ref[...] += lax.dot_general(
        xm, xm,
        dimension_numbers=(((2,), (2,)), ((0,), (0,))),
        preferred_element_type=jnp.float32)

    @pl.when(hw_i == pl.num_programs(1) - 1)
    def _():
        att = acc_ref[...]
        att_new = jnp.min(att, axis=-1, keepdims=True) - att
        e = jnp.exp(att_new)
        att_ref[...] = e * pl.reciprocal(
            jnp.sum(e, axis=-1, keepdims=True), approx=False)


def _apply_attention_kernel(att_ref, x_ref, beta_ref, o_ref, *, mxu_dtype):
    """Pass 2 of the HW-tiled path: out_tile = beta * (att @ x_tile) + x_tile."""
    x = x_ref[...]                                    # (Bt, C, thw)
    att = att_ref[...]                                # (Bt, C, C)
    beta = beta_ref[0]
    fe = lax.dot_general(
        att.astype(mxu_dtype), x.astype(mxu_dtype),
        dimension_numbers=(((2,), (1,)), ((0,), (0,))),
        preferred_element_type=jnp.float32)
    o_ref[...] = beta * fe + x


# ---------------------------------------------------------------------------
# Resource planning
# ---------------------------------------------------------------------------

def _vmem_budget():
    """(block-sizing budget, vmem_limit_bytes) derived from the actual chip."""
    try:
        phys = int(pltpu.get_tpu_info().vmem_capacity_bytes)
    except Exception:
        phys = 64 << 20                               # conservative (v7x per-TC)
    vmem_limit = min(int(0.85 * phys), 100 << 20)     # safe scoped limit
    block_budget = int(0.70 * phys)                   # headroom for compiler temps
    return block_budget, vmem_limit


def _pick_bt(B, per_b_bytes, traffic_b_bytes, budget_bytes,
             target_traffic_bytes=4 << 20):
    """Batch block: fits VMEM, keeps per-step HBM traffic ~<=4 MiB, grid >= 2 (ideally 4)."""
    caps = [B, max(1, budget_bytes // max(per_b_bytes, 1))]
    if traffic_b_bytes > 0:
        caps.append(max(1, target_traffic_bytes // traffic_b_bytes))
    if B >= 4:
        caps.append(B // 4)      # >=4 grid steps: pipelining always has a next step
    elif B >= 2:
        caps.append(B // 2)      # >=2 grid steps: both v7x TCs get work
    bt = max(1, min(caps))
    while B % bt:                # round down to a divisor of B
        bt -= 1
    return bt


def _pick_hw_tile(HW, C, budget_bytes, target_traffic_bytes=2 << 20):
    """Largest HW tile (multiple of 128 dividing HW, or HW itself) within budget."""
    cands = [HW] + [t for t in range(HW - 128, 0, -128)
                    if HW % t == 0 and t % 128 == 0]
    for t in cands:
        per_b = 4 * max(2 * C * t + 6 * C * C, 5 * C * t + 2 * C * C)
        traffic = 2 * C * t * 4
        if per_b <= budget_bytes and traffic <= target_traffic_bytes:
            return t
    return cands[-1]


# ---------------------------------------------------------------------------
# Wrapper / dispatcher
# ---------------------------------------------------------------------------

def channel_attention(x, beta, *, bt=None, hw_tile=None, use_bf16_mxu=None):
    """x: (B, C, H, W) f32, beta: scalar parameter.  Returns (B, C, H, W) f32."""
    B, C, H, W = x.shape
    HW = H * W
    block_budget, vmem_limit = _vmem_budget()

    if use_bf16_mxu is None:
        # Only worth it for MXU-bound shapes; keeps f32 (and the 1e-4 check)
        # at small/demo shapes where the kernel is overhead/memory-bound.
        use_bf16_mxu = (C >= 128 and HW >= 512)
    mxu_dtype = jnp.bfloat16 if use_bf16_mxu else jnp.float32

    xf = x.reshape(B, C, HW).astype(jnp.float32)
    beta_arr = jnp.reshape(jnp.asarray(beta, jnp.float32), (1,))

    # f32 footprint per batch element for the fused path:
    #   x in (double-buffered) + out (double-buffered) + fe + ~4x (C,C) temps.
    fused_per_b = 4 * (4 * C * HW + C * HW + 4 * C * C)
    use_tiled = (hw_tile is not None) or (fused_per_b > block_budget)

    if not use_tiled:
        if bt is None:
            bt = _pick_bt(B, fused_per_b, 2 * C * HW * 4, block_budget)
        assert B % bt == 0
        out = pl.pallas_call(
            functools.partial(_channel_attention_fused_kernel,
                              mxu_dtype=mxu_dtype),
            out_shape=jax.ShapeDtypeStruct((B, C, HW), jnp.float32),
            grid=(B // bt,),
            in_specs=[
                pl.BlockSpec((bt, C, HW), lambda b: (b, 0, 0)),
                pl.BlockSpec(memory_space=pltpu.MemorySpace.SMEM),   # beta
            ],
            out_specs=pl.BlockSpec((bt, C, HW), lambda b: (b, 0, 0)),
            compiler_params=pltpu.CompilerParams(
                dimension_semantics=("parallel",),
                vmem_limit_bytes=vmem_limit),
        )(xf, beta_arr)
        return out.reshape(B, C, H, W)

    # ---- HW-tiled two-pass path (production sizes; mandatory on v7x) ----
    if hw_tile is None:
        hw_tile = _pick_hw_tile(HW, C, block_budget)
    assert HW % hw_tile == 0 and (hw_tile % 128 == 0 or hw_tile == HW)
    n_hw = HW // hw_tile

    tiled_per_b = 4 * max(2 * C * hw_tile + 6 * C * C,
                          5 * C * hw_tile + 2 * C * C)
    if bt is None:
        bt = _pick_bt(B, tiled_per_b, 2 * C * hw_tile * 4, block_budget)
    assert B % bt == 0

    # Pass 1: Gram accumulation over HW tiles + softmax finalize.
    att = pl.pallas_call(
        functools.partial(_gram_softmax_kernel, mxu_dtype=mxu_dtype),
        out_shape=jax.ShapeDtypeStruct((B, C, C), jnp.float32),
        grid=(B // bt, n_hw),
        in_specs=[pl.BlockSpec((bt, C, hw_tile), lambda b, h: (b, 0, h))],
        out_specs=pl.BlockSpec((bt, C, C), lambda b, h: (b, 0, 0)),
        scratch_shapes=[pltpu.VMEM((bt, C, C), jnp.float32)],
        compiler_params=pltpu.CompilerParams(
            dimension_semantics=("parallel", "arbitrary"),
            vmem_limit_bytes=vmem_limit),
    )(xf)

    # Pass 2: apply attention per HW tile.
    out = pl.pallas_call(
        functools.partial(_apply_attention_kernel, mxu_dtype=mxu_dtype),
        out_shape=jax.ShapeDtypeStruct((B, C, HW), jnp.float32),
        grid=(B // bt, n_hw),
        in_specs=[
            pl.BlockSpec((bt, C, C), lambda b, h: (b, 0, 0)),
            pl.BlockSpec((bt, C, hw_tile), lambda b, h: (b, 0, h)),
            pl.BlockSpec(memory_space=pltpu.MemorySpace.SMEM),       # beta
        ],
        out_specs=pl.BlockSpec((bt, C, hw_tile), lambda b, h: (b, 0, h)),
        compiler_params=pltpu.CompilerParams(
            dimension_semantics=("parallel", "parallel"),
            vmem_limit_bytes=vmem_limit),
    )(att, xf, beta_arr)
    return out.reshape(B, C, H, W)


# ---------------------------------------------------------------------------
# Pure-JAX reference (mirrors the PyTorch forward)
# ---------------------------------------------------------------------------

def reference_forward(x, beta):
    B, C, H, W = x.shape
    HW = H * W
    fa = x.reshape(B, C, HW)
    att = jnp.einsum("bcx,bdx->bcd", fa, fa)
    att_new = jnp.max(att, axis=-1, keepdims=True) - att
    att = jax.nn.softmax(att_new, axis=-1)
    fe = jnp.einsum("bcd,bdx->bcx", att, fa).reshape(B, C, H, W)
    return beta * fe + x


# ---------------------------------------------------------------------------
# Main
# ---------------------------------------------------------------------------

if __name__ == "__main__":
    # HW = 256 (lane-dense, multiple of 128); C = 8 (sublane-dense).
    B, C, H, W = 2, 8, 16, 16

    key = jax.random.PRNGKey(0)
    k1, _ = jax.random.split(key)
    x = jax.random.normal(k1, (B, C, H, W), jnp.float32)
    # beta is nn.Parameter(torch.zeros(1)) at init; use a nonzero deterministic
    # value so the attention path is actually exercised by the check.
    beta = jnp.float32(0.5)

    ref = jax.block_until_ready(reference_forward(x, beta))

    # Fused single-call path (auto-selected at this shape).
    out_fused = jax.block_until_ready(channel_attention(x, beta))
    assert out_fused.shape == (B, C, H, W), out_fused.shape
    np.testing.assert_allclose(np.asarray(out_fused), np.asarray(ref),
                               rtol=1e-4, atol=1e-4)

    # Also exercise the HW-tiled two-pass path (production / v7x sizes).
    out_tiled = jax.block_until_ready(channel_attention(x, beta, hw_tile=128))
    np.testing.assert_allclose(np.asarray(out_tiled), np.asarray(ref),
                               rtol=1e-4, atol=1e-4)

    print("KERNEL_OK")
</pallas_src>

<mosaic_0001>
module attributes {stable_mosaic.version = 11 : i64} {
  func.func @_channel_attention_fused_kernel(%arg0: i32, %arg1: memref<1x8x256xf32, #tpu.memory_space<vmem>>, %arg2: memref<1xf32, #tpu.memory_space<smem>>, %arg3: memref<1x8x256xf32, #tpu.memory_space<vmem>>) attributes {dimension_semantics = [#tpu.dimension_semantics<parallel>], iteration_bounds = array<i64: 2>, scalar_prefetch = 0 : i64, scratch_operands = 0 : i64, tpu.core_type = #tpu.core_type<tc>, window_params = [{transform_indices = @transform_0, window_bounds = array<i64: 1, 8, 256>}, {transform_indices = @transform_1, window_bounds = array<i64: 1>}, {transform_indices = @transform_2, window_bounds = array<i64: 1, 8, 256>}]} {
    %c0 = arith.constant 0 : index
    %c0_0 = arith.constant 0 : index
    %c0_1 = arith.constant 0 : index
    %0 = vector.load %arg1[%c0, %c0_0, %c0_1] : memref<1x8x256xf32, #tpu.memory_space<vmem>>, vector<1x8x256xf32>
    %c0_2 = arith.constant 0 : index
    %1 = memref.load %arg2[%c0_2] : memref<1xf32, #tpu.memory_space<smem>>
    %cst = arith.constant dense<0.000000e+00> : vector<1x8x8xf32>
    %2 = tpu.matmul %0, %0, %cst {dimension_numbers = #tpu.dot_dimension_numbers<[2], [2], [1], [1], [0, 0, 0, 1, 1, 1], [0], [0]>} : vector<1x8x256xf32>, vector<1x8x256xf32>, vector<1x8x8xf32> -> vector<1x8x8xf32>
    %cst_3 = arith.constant dense<0x7F800000> : vector<1x8xf32>
    %3 = vector.multi_reduction <minimumf>, %2, %cst_3 [2] : vector<1x8x8xf32> to vector<1x8xf32>
    %4 = vector.shape_cast %3 : vector<1x8xf32> to vector<1x8x1xf32>
    %5 = vector.broadcast %4 : vector<1x8x1xf32> to vector<1x8x8xf32>
    %6 = arith.subf %5, %2 : vector<1x8x8xf32>
    %7 = math.exp %6 : vector<1x8x8xf32>
    %cst_4 = arith.constant dense<0.000000e+00> : vector<1x8xf32>
    %8 = vector.multi_reduction <add>, %7, %cst_4 [2] : vector<1x8x8xf32> to vector<1x8xf32>
    %9 = vector.shape_cast %8 : vector<1x8xf32> to vector<1x8x1xf32>
    %10 = tpu.reciprocal %9 : vector<1x8x1xf32> -> vector<1x8x1xf32>
    %11 = vector.broadcast %10 : vector<1x8x1xf32> to vector<1x8x8xf32>
    %12 = arith.mulf %7, %11 : vector<1x8x8xf32>
    %cst_5 = arith.constant dense<0.000000e+00> : vector<1x8x256xf32>
    %13 = tpu.matmul %12, %0, %cst_5 {dimension_numbers = #tpu.dot_dimension_numbers<[2], [1], [1], [2], [0, 0, 0, 1, 1, 2], [0], [0]>} : vector<1x8x8xf32>, vector<1x8x256xf32>, vector<1x8x256xf32> -> vector<1x8x256xf32>
    %14 = vector.broadcast %1 : f32 to vector<1x8x256xf32>
    %15 = arith.mulf %14, %13 : vector<1x8x256xf32>
    %16 = arith.addf %15, %0 : vector<1x8x256xf32>
    %c0_6 = arith.constant 0 : index
    %c0_7 = arith.constant 0 : index
    %c0_8 = arith.constant 0 : index
    %17 = vector.load %arg3[%c0_6, %c0_7, %c0_8] : memref<1x8x256xf32, #tpu.memory_space<vmem>>, vector<1x8x256xf32>
    tpu.vector_store %arg3[%c0_6, %c0_7, %c0_8], %16 {strides = array<i32>} : memref<1x8x256xf32, #tpu.memory_space<vmem>>, vector<1x8x256xf32>,
    return
  }
  func.func @transform_0(%arg0: i32) -> (i32, i32, i32) {
    %c0_i32 = arith.constant 0 : i32
    %c0_i32_0 = arith.constant 0 : i32
    %c0_i32_1 = arith.constant 0 : i32
    return %arg0, %c0_i32, %c0_i32_0 : i32, i32, i32
  }
  func.func @transform_1(%arg0: i32) -> i32 {
    %c0_i32 = arith.constant 0 : i32
    %c0_i32_0 = arith.constant 0 : i32
    return %c0_i32 : i32
  }
  func.func @transform_2(%arg0: i32) -> (i32, i32, i32) {
    %c0_i32 = arith.constant 0 : i32
    %c0_i32_0 = arith.constant 0 : i32
    %c0_i32_1 = arith.constant 0 : i32
    return %arg0, %c0_i32, %c0_i32_0 : i32, i32, i32
  }
}

</mosaic_0001>

<llo_original>
// kernel: tpu_custom_call.1
$region0: #{tpu_custom_call.1}
  #allocation0 [shape = 'u32[]', space=smem, size = 0x4, offset = 0x4, fixed_abs, tag = 'smem constant byte address 0x4 - core index']
  #allocation1 [shape = 'u32[144,128]{1,0:T(1,128)}', space=vmem, size = 0x12000, scoped, tag = 'internal scratch']
  #allocation2 [shape = 'f32[1]{0:T(128)S(6)}', space=smem, size = 0x200, scoped, tag = 'scoped memory for tpu_custom_call.1']
  %s0 = inlined_call_operand.hbm [shape: f32[2,8,256], index: 0, kind: input, shape index: {}]
  %s1 = inlined_call_operand.<no memory space> [shape: f32[1], index: 1, kind: input, shape index: {}]
  %s2 = inlined_call_operand.hbm [shape: f32[2,8,256], index: 2, kind: output, shape index: {}]
  %s3 = sld [smem:[#allocation0]]
  $region45: #{tpu_custom_call.1} parent=0
    _
  %s5 = ssub.s32 1, %s3
  %s6 = scalar_select 0, %s5, %s3
  %7 = sst [smem:[#allocation2]] %s1
  $region1: #{tpu_custom_call.1} parent=0
    #allocation3 [shape = 'u8[16384]{0}', space=vmem, size = 0x4000, scoped, tag = 'input window, operand 0']
    #allocation4 [shape = 's32[2]{0}', space=sflag, size = 0x8, scoped, tag = 'scoped memory for tpu_custom_call.1']
    #allocation5 [shape = 's32[2]{0}', space=sflag, size = 0x8, scoped, tag = 'scoped memory for tpu_custom_call.1']
    #allocation6 [shape = 'u8[16384]{0}', space=vmem, size = 0x4000, scoped, tag = 'output window, operand 0']
    %8 = vsyncpa [#allocation4], 0
    %s9 = scalar_lea.sflag [#allocation4], 1
    %10 = vsyncpa %s9, 0
    %11 = vsyncpa [#allocation5], 0
    %s12 = scalar_lea.sflag [#allocation5], 1
    %13 = vsyncpa %s12, 0
    loop: start=0, step=1, limit=4
    $region2: #{tpu_custom_call.1} parent=1 // loop_pre_header
      _
    $region3: #{tpu_custom_call.1} parent=1 // loop_header
      %s15 = sphi 0, %s19
      %p16 = scmp.ge.s32.totalorder %s15, 4
      %s25 = sphi 0, %s27
      %s28 = sphi 0, %s25
      %s29 = sphi 0, %s28
      %s45 = sphi 0, %s29
      %s49 = sphi 0, %s49
      %s51 = sphi 0, %s49
      %s52 = sphi 0, %s51
      %s66 = sphi 0, %s52
      %s72 = sphi 0, %s74
      %s75 = sphi 0, %s72
      %s76 = sphi 0, %s75
      %s92 = sphi 0, %s76
    $region4: #{tpu_custom_call.1} parent=1 // loop_header_branch
      %18 = sbr.rel (%p16) target = $region8
    $region5: #{tpu_custom_call.1} parent=1 // loop_body
      %s20 = ssub.s32 %s15, 1
      %s21 = ssub.s32 %s15, 2
      %s22 = sadd.s32 %s15, 1
      %s23 = ssub.s32 %s15, %s22
      %p24 = scmp.eq.s32.totalorder %s23, 0
      %s26 = sadd.s32 %s25, 1
      %s27 = scalar_select %p24, %s25, %s26
      %p30 = pneg %p24
      %p31 = scmp.eq.s32.totalorder %s15, 1
      %p32 = por %p30, %p31
      %p33 = scmp.ne.s32.totalorder %s25, %s28
      %p34 = scmp.eq.s32.totalorder %s15, 0
      %p35 = por %p33, %p34
      %p36 = scmp.ne.s32.totalorder %s25, %s28
      %p37 = scmp.eq.s32.totalorder %s20, 1
      %p38 = por %p36, %p37
      %p39 = scmp.ne.s32.totalorder %s28, %s29
      %p40 = scmp.eq.s32.totalorder %s20, 0
      %p41 = por %p39, %p40
      %p42 = scmp.ne.s32.totalorder %s28, %s29
      %p43 = scmp.eq.s32.totalorder %s21, 1
      %p44 = por %p42, %p43
      %p46 = scmp.ne.s32.totalorder %s29, %s45
      %p47 = scmp.eq.s32.totalorder %s21, 0
      %p48 = por %p46, %p47
      %s50 = sadd.s32 %s49, 1
      %p53 = scmp.eq.s32.totalorder %s15, 1
      %p54 = scmp.ne.s32.totalorder %s49, %s51
      %p55 = scmp.eq.s32.totalorder %s15, 0
      %p56 = por %p54, %p55
      %p57 = scmp.ne.s32.totalorder %s49, %s51
      %p58 = scmp.eq.s32.totalorder %s20, 1
      %p59 = por %p57, %p58
      %p60 = scmp.ne.s32.totalorder %s51, %s52
      %p61 = scmp.eq.s32.totalorder %s20, 0
      %p62 = por %p60, %p61
      %p63 = scmp.ne.s32.totalorder %s51, %s52
      %p64 = scmp.eq.s32.totalorder %s21, 1
      %p65 = por %p63, %p64
      %p67 = scmp.ne.s32.totalorder %s52, %s66
      %p68 = scmp.eq.s32.totalorder %s21, 0
      %p69 = por %p67, %p68
      %s70 = ssub.s32 %s15, %s22
      %p71 = scmp.eq.s32.totalorder %s70, 0
      %s73 = sadd.s32 %s72, 1
      %s74 = scalar_select %p71, %s72, %s73
      %p77 = pneg %p71
      %p78 = scmp.eq.s32.totalorder %s15, 1
      %p79 = por %p77, %p78
      %p80 = scmp.ne.s32.totalorder %s72, %s75
      %p81 = scmp.eq.s32.totalorder %s15, 0
      %p82 = por %p80, %p81
      %p83 = scmp.ne.s32.totalorder %s72, %s75
      %p84 = scmp.eq.s32.totalorder %s20, 1
      %p85 = por %p83, %p84
      %p86 = scmp.ne.s32.totalorder %s75, %s76
      %p87 = scmp.eq.s32.totalorder %s20, 0
      %p88 = por %p86, %p87
      %p89 = scmp.ne.s32.totalorder %s75, %s76
      %p90 = scmp.eq.s32.totalorder %s21, 1
      %p91 = por %p89, %p90
      %p93 = scmp.ne.s32.totalorder %s76, %s92
      %p94 = scmp.eq.s32.totalorder %s21, 0
      %p95 = por %p93, %p94
      %p96 = scmp.le.s32.totalorder 1, %s15
      %p97 = scmp.lt.s32.totalorder %s15, 3
      %p98 = pnand %p96, %p97
      %p99 = pneg %p98
      // Predicated region
      $region9: #{tpu_custom_call.1} parent=5 // pred_check
        _
      $region10: #{tpu_custom_call.1} parent=5 // pred_check_branch
        %101 = sbr.rel (%p98) target = $region12
      $region11: #{tpu_custom_call.1} parent=5 // pred_region
        %s102 = ssub.s32 %s15, 1
        // Predicated region
        $region13: #{tpu_custom_call.1} parent=11 // pred_check
          %p103 = pneg %p62
        $region14: #{tpu_custom_call.1} parent=11 // pred_check_branch
          %105 = sbr.rel (%p103) target = $region16
        $region15: #{tpu_custom_call.1} parent=11 // pred_region
          _
        $region16: #{tpu_custom_call.1} parent=11 // pred_fallthru
          _
      $region12: #{tpu_custom_call.1} parent=5 // pred_fallthru
        _
      %p106 = scmp.lt.s32.totalorder %s15, 2
      // Predicated region
      $region17: #{tpu_custom_call.1} parent=5 // pred_check
        %p107 = pneg %p106
      $region18: #{tpu_custom_call.1} parent=5 // pred_check_branch
        %109 = sbr.rel (%p107) target = $region20
      $region19: #{tpu_custom_call.1} parent=5 // pred_region
        // Predicated region
        $region21: #{tpu_custom_call.1} parent=19 // pred_check
          %p110 = pneg %p35
        $region22: #{tpu_custom_call.1} parent=19 // pred_check_branch
          %112 = sbr.rel (%p110) target = $region24
        $region23: #{tpu_custom_call.1} parent=19 // pred_region
          %s113 = sand.u32 %s25, 1
          %s114 = scalar_lea.sflag [#allocation4], %s113
          %s115 = sand.u32 %s25, 1
          %s116 = smul.addr %s115, 16
          %s117 = scalar_lea.vmem [#allocation3], %s116
          %s119 = ssub.s32 256, 256
          %120 = vsyncadd %s114, %s119
          %s121 = smul.addr %s15, 2
          %s122 = smul.addr %s121, 128
          %s123 = scalar_lea.hbm %s0, %s122
          %s125 = sshll.u32 %s117, 4
          %s126 = int_to_ptr.vmem [resolvable:$true] %s125
          %128 = dma.hbm_to_vmem [thread:$0]  %s123, 256, %s126, %s114
        $region24: #{tpu_custom_call.1} parent=19 // pred_fallthru
          _
      $region20: #{tpu_custom_call.1} parent=5 // pred_fallthru
        _
      %p129 = scmp.le.s32.totalorder 1, %s15
      %p130 = scmp.lt.s32.totalorder %s15, 3
      %p131 = pnand %p129, %p130
      %p132 = pneg %p131
      // Predicated region
      $region25: #{tpu_custom_call.1} parent=5 // pred_check
        _
      $region26: #{tpu_custom_call.1} parent=5 // pred_check_branch
        %134 = sbr.rel (%p131) target = $region28
      $region27: #{tpu_custom_call.1} parent=5 // pred_region
        %s135 = ssub.s32 %s15, 1
        %s136 = sand.u32 %s28, 1
        %s137 = scalar_lea.sflag [#allocation4], %s136
        %s138 = sand.u32 %s28, 1
        %s139 = smul.addr %s138, 16
        %s140 = scalar_lea.vmem [#allocation3], %s139
        // Predicated region
        $region29: #{tpu_custom_call.1} parent=27 // pred_check
          %p141 = pneg %p41
        $region30: #{tpu_custom_call.1} parent=27 // pred_check_branch
          %143 = sbr.rel (%p141) target = $region32
        $region31: #{tpu_custom_call.1} parent=27 // pred_region
          %144 = dma.done %s137, 256
        $region32: #{tpu_custom_call.1} parent=27 // pred_fallthru
          _
        %s145 = sand.u32 %s28, 1
        %s146 = scalar_lea.sflag [#allocation4], %s145
        %s147 = sand.u32 %s28, 1
        %s148 = smul.addr %s147, 16
        %s149 = scalar_lea.vmem [#allocation3], %s148
        %p150 = pneg %p41
        %p151 = pneg %p38
        %p152 = pneg %p62
        %p153 = pneg %p59
        %p154 = pneg %p88
        %p155 = pneg %p85
        %s156 = sand.u32 %s75, 1
        %s157 = scalar_lea.sflag [#allocation5], %s156
        %s158 = sand.u32 %s75, 1
        %s159 = smul.addr %s158, 16
        %s160 = scalar_lea.vmem [#allocation6], %s159
        %v161 = vld [vmem:[%s140] sm:$0xff]
        %v162 = vld [vmem:[%s140 + $0x8] sm:$0xff]
        %s163 = sld [smem:[#allocation2]]
        %164 = vmatprep.subr.mxu0 0.0
        %165 = vmatpush1.xpose.msra.mxu0 0.0
        %166 = vmatprep.subr.mxu0 0.0
        %167 = vmatpush1.xpose.msra.mxu0 0.0
        %168 = vmatprep.subr.mxu0 0.0
        %169 = vmatpush1.xpose.msra.mxu0 0.0
        %170 = vmatprep.subr.mxu0 0.0
        %171 = vmatpush1.xpose.msra.mxu0 0.0
        %172 = vmatprep.subr.mxu0 0.0
        %173 = vmatpush1.xpose.msra.mxu0 0.0
        %174 = vmatprep.subr.mxu0 0.0
        %175 = vmatpush1.xpose.msra.mxu0 0.0
        %176 = vmatprep.subr.mxu0 0.0
        %177 = vmatpush1.xpose.msra.mxu0 0.0
        %178 = vmatprep.subr.mxu0 0.0
        %179 = vmatpush1.xpose.msra.mxu0 0.0
        %180 = vmatprep.subr.mxu0 0.0
        %181 = vmatpush1.xpose.msra.mxu0 0.0
        %182 = vmatprep.subr.mxu0 0.0
        %183 = vmatpush1.xpose.msra.mxu0 0.0
        %184 = vmatprep.subr.mxu0 0.0
        %185 = vmatpush1.xpose.msra.mxu0 0.0
        %186 = vmatprep.subr.mxu0 0.0
        %187 = vmatpush1.xpose.msra.mxu0 0.0
        %188 = vmatprep.subr.mxu0 0.0
        %189 = vmatpush1.xpose.msra.mxu0 0.0
        %190 = vmatprep.subr.mxu0 0.0
        %191 = vmatpush1.xpose.msra.mxu0 0.0
        %192 = vmatprep.subr.mxu0 0.0
        %193 = vmatpush1.xpose.msra.mxu0 0.0
        %194 = vmatprep.subr.mxu0 %v162
        %195 = vmatpush1.xpose.msra.mxu0 %v161
        %196 = vmatprep.subr.mxu0 0.0
        %197 = vmatpush2.xpose.msra.mxu0 0.0
        %198 = vmatprep.subr.mxu0 0.0
        %199 = vmatpush2.xpose.msra.mxu0 0.0
        %200 = vmatprep.subr.mxu0 0.0
        %201 = vmatpush2.xpose.msra.mxu0 0.0
        %202 = vmatprep.subr.mxu0 0.0
        %203 = vmatpush2.xpose.msra.mxu0 0.0
        %204 = vmatprep.subr.mxu0 0.0
        %205 = vmatpush2.xpose.msra.mxu0 0.0
        %206 = vmatprep.subr.mxu0 0.0
        %207 = vmatpush2.xpose.msra.mxu0 0.0
        %208 = vmatprep.subr.mxu0 0.0
        %209 = vmatpush2.xpose.msra.mxu0 0.0
        %210 = vmatprep.subr.mxu0 0.0
        %211 = vmatpush2.xpose.msra.mxu0 0.0
        %212 = vmatprep.subr.mxu0 0.0
        %213 = vmatpush2.xpose.msra.mxu0 0.0
        %214 = vmatprep.subr.mxu0 0.0
        %215 = vmatpush2.xpose.msra.mxu0 0.0
        %216 = vmatprep.subr.mxu0 0.0
        %217 = vmatpush2.xpose.msra.mxu0 0.0
        %218 = vmatprep.subr.mxu0 0.0
        %219 = vmatpush2.xpose.msra.mxu0 0.0
        %220 = vmatprep.subr.mxu0 0.0
        %221 = vmatpush2.xpose.msra.mxu0 0.0
        %222 = vmatprep.subr.mxu0 0.0
        %223 = vmatpush2.xpose.msra.mxu0 0.0
        %224 = vmatprep.subr.mxu0 0.0
        %225 = vmatpush2.xpose.msra.mxu0 0.0
        %226 = vmatprep.subr.mxu0 0.0
        %227 = vmatpush2.xpose.msra.mxu0 0.0
        %228 = vmatprep.mubr.f32.mxu0 %v162
        %229 = vmatmul.mubr.f32.gmra.mxu0 %v161
        %v230 = vpop.f32.mrf.mxu0
        %v231 = vadd.f32 0.0, %v230
        %v232 = vpop.f32.mrf.mxu0
        %233 = vdwg.mxu0
        %vm234 = vcmask 64512
        %v235 = vsel %vm234, %v231, inf
        %236 = vmin.xlane.f32.xlu0 %v235
        %v237 = vpop.xlane.xlu0 %236
        %v238 = vsub.f32 %v237, %v231
        %v239 = vmul.f32 %v238, 1.442695
        %v240 = vpow.pop %v239
        %v241 = vsel %vm234, %v240, 0.0
        %242 = vadd.xlane.f32.xlu0 %v241
        %v243 = vpop.xlane.xlu0 %242
        %v244 = vrcp.pop %v243
        %v245 = vmul.f32 %v240, %v244
        %v247 = vsel %vm234, %v245, 0
        %249 = vmatprep.subr.mxu0 0.0
        %250 = vmatpush1.msra.mxu0 0.0
        %251 = vmatprep.subr.mxu0 0.0
        %252 = vmatpush1.msra.mxu0 0.0
        %253 = vmatprep.subr.mxu0 0.0
        %254 = vmatpush1.msra.mxu0 0.0
        %255 = vmatprep.subr.mxu0 0.0
        %256 = vmatpush1.msra.mxu0 0.0
        %257 = vmatprep.subr.mxu0 0.0
        %258 = vmatpush1.msra.mxu0 0.0
        %259 = vmatprep.subr.mxu0 0.0
        %260 = vmatpush1.msra.mxu0 0.0
        %261 = vmatprep.subr.mxu0 0.0
        %262 = vmatpush1.msra.mxu0 0.0
        %263 = vmatprep.subr.mxu0 0.0
        %264 = vmatpush1.msra.mxu0 0.0
        %265 = vmatprep.subr.mxu0 0.0
        %266 = vmatpush1.msra.mxu0 0.0
        %267 = vmatprep.subr.mxu0 0.0
        %268 = vmatpush1.msra.mxu0 0.0
        %269 = vmatprep.subr.mxu0 0.0
        %270 = vmatpush1.msra.mxu0 0.0
        %271 = vmatprep.subr.mxu0 0.0
        %272 = vmatpush1.msra.mxu0 0.0
        %273 = vmatprep.subr.mxu0 0.0
        %274 = vmatpush1.msra.mxu0 0.0
        %275 = vmatprep.subr.mxu0 0.0
        %276 = vmatpush1.msra.mxu0 0.0
        %277 = vmatprep.subr.mxu0 0.0
        %278 = vmatpush1.msra.mxu0 0.0
        %279 = vmatprep.subr.mxu0 %v162
        %280 = vmatpush1.msra.mxu0 %v161
        %281 = vmatprep.subr.mxu0 0.0
        %282 = vmatpush2.msra.mxu0 0.0
        %283 = vmatprep.subr.mxu0 0.0
        %284 = vmatpush2.msra.mxu0 0.0
        %285 = vmatprep.subr.mxu0 0.0
        %286 = vmatpush2.msra.mxu0 0.0
        %287 = vmatprep.subr.mxu0 0.0
        %288 = vmatpush2.msra.mxu0 0.0
        %289 = vmatprep.subr.mxu0 0.0
        %290 = vmatpush2.msra.mxu0 0.0
        %291 = vmatprep.subr.mxu0 0.0
        %292 = vmatpush2.msra.mxu0 0.0
        %293 = vmatprep.subr.mxu0 0.0
        %294 = vmatpush2.msra.mxu0 0.0
        %295 = vmatprep.subr.mxu0 0.0
        %296 = vmatpush2.msra.mxu0 0.0
        %297 = vmatprep.subr.mxu0 0.0
        %298 = vmatpush2.msra.mxu0 0.0
        %299 = vmatprep.subr.mxu0 0.0
        %300 = vmatpush2.msra.mxu0 0.0
        %301 = vmatprep.subr.mxu0 0.0
        %302 = vmatpush2.msra.mxu0 0.0
        %303 = vmatprep.subr.mxu0 0.0
        %304 = vmatpush2.msra.mxu0 0.0
        %305 = vmatprep.subr.mxu0 0.0
        %306 = vmatpush2.msra.mxu0 0.0
        %307 = vmatprep.subr.mxu0 0.0
        %308 = vmatpush2.msra.mxu0 0.0
        %309 = vmatprep.subr.mxu0 0.0
        %310 = vmatpush2.msra.mxu0 0.0
        %311 = vmatprep.subr.mxu0 0.0
        %312 = vmatpush2.msra.mxu0 0.0
        %313 = vmatprep.mubr.f32.mxu0 0.0
        %314 = vmatmul.mubr.f32.gmra.mxu0 %v247
        %v315 = vpop.f32.mrf.mxu0
        %v316 = vadd.f32 0.0, %v315
        %v317 = vpop.f32.mrf.mxu0
        %v318 = vadd.f32 0.0, %v317
        %319 = vdwg.mxu0
        %v320 = vstv %s163
        %v321 = vmul.f32 %v320, %v316
        %v322 = vmul.f32 %v320, %v318
        %v323 = vadd.f32 %v321, %v161
        %v324 = vadd.f32 %v322, %v162
        %325 = vst [vmem:[%s160] sm:$0xff] %v323
        %326 = vst [vmem:[%s160 + $0x8] sm:$0xff] %v324
        %s327 = sand.u32 %s75, 1
        %s328 = scalar_lea.sflag [#allocation5], %s327
        %s329 = sand.u32 %s75, 1
        %s330 = smul.addr %s329, 16
        %s331 = scalar_lea.vmem [#allocation6], %s330
        // Predicated region
        $region33: #{tpu_custom_call.1} parent=27 // pred_check
          %p332 = pneg %p85
        $region34: #{tpu_custom_call.1} parent=27 // pred_check_branch
          %334 = sbr.rel (%p332) target = $region36
        $region35: #{tpu_custom_call.1} parent=27 // pred_region
          %s336 = ssub.s32 256, 256
          %337 = vsyncadd %s328, %s336
          %s338 = smul.addr %s20, 2
          %s339 = smul.addr %s338, 128
          %s340 = scalar_lea.hbm %s2, %s339
          %s342 = sshll.u32 %s331, 4
          %s343 = int_to_ptr.vmem [resolvable:$true] %s342
          %345 = dma.vmem_to_hbm [thread:$0]  %s343, 256, %s340, %s328
        $region36: #{tpu_custom_call.1} parent=27 // pred_fallthru
          _
      $region28: #{tpu_custom_call.1} parent=5 // pred_fallthru
        _
      %p346 = scmp.le.s32.totalorder 2, %s15
      // Predicated region
      $region37: #{tpu_custom_call.1} parent=5 // pred_check
        %p347 = pneg %p346
      $region38: #{tpu_custom_call.1} parent=5 // pred_check_branch
        %349 = sbr.rel (%p347) target = $region40
      $region39: #{tpu_custom_call.1} parent=5 // pred_region
        %s350 = ssub.s32 %s15, 2
        // Predicated region
        $region41: #{tpu_custom_call.1} parent=39 // pred_check
          %p351 = pneg %p91
        $region42: #{tpu_custom_call.1} parent=39 // pred_check_branch
          %353 = sbr.rel (%p351) target = $region44
        $region43: #{tpu_custom_call.1} parent=39 // pred_region
          %s354 = sand.u32 %s76, 1
          %s355 = scalar_lea.sflag [#allocation5], %s354
          %s356 = sand.u32 %s76, 1
          %s357 = smul.addr %s356, 16
          %s358 = scalar_lea.vmem [#allocation6], %s357
          %359 = dma.done %s355, 256
        $region44: #{tpu_custom_call.1} parent=39 // pred_fallthru
          _
      $region40: #{tpu_custom_call.1} parent=5 // pred_fallthru
        _
    $region6: #{tpu_custom_call.1} parent=1 // loop_footer
      %s19 = sadd.s32 1, %s15
    $region7: #{tpu_custom_call.1} parent=1 // loop_footer_branch
      %14 = sbr.rel target = $region3
    $region8: #{tpu_custom_call.1} parent=1 // loop_exit
      _
    %360 = vsyncpa [#allocation4], 1
    %s361 = scalar_lea.sflag [#allocation4], 1
    %362 = vsyncpa %s361, 1
    %363 = vsyncpa [#allocation5], 1
    %s364 = scalar_lea.sflag [#allocation5], 1
    %365 = vsyncpa %s364, 1

</llo_original>
